<compile_context>
chip_gen: v7x
topology: tpu7x:2x2x1
jax: 0.10.0
libtpu: 0.0.40
codegen_flags: <defaults>
</compile_context>

<pallas_src>
import functools
import math

import jax
import jax.numpy as jnp
from jax.experimental import pallas as pl
from jax.experimental.pallas import tpu as pltpu


_EPS = 1e-6


def _sublane_pack(dtype) -> int:
    # Rows per packed vreg sublane group: f32 -> 8, bf16/f16 -> 16, 8-bit -> 32.
    return max(8, 32 // jnp.dtype(dtype).itemsize)


def _round_up(x, m):
    return ((x + m - 1) // m) * m


def _chip_kind() -> str:
    try:
        return jax.devices()[0].device_kind.lower()
    except Exception:
        return ""


def _choose_row_tile(rows, n_lane, in_dtype, out_dtype, *, multi_core, big_vmem):
    """Pick the number of (lane-packed) rows per grid step."""
    in_b = jnp.dtype(in_dtype).itemsize
    out_b = jnp.dtype(out_dtype).itemsize
    align = max(_sublane_pack(in_dtype), _sublane_pack(out_dtype))
    # Per-row working set:
    #   pipeline buffers: q + k inputs and qo + ko outputs, each double-buffered
    #   in-kernel f32 temporaries: q/k casts, squared tiles, MXU results,
    #   scaled products  (~8 full-tile f32 intermediates, conservatively).
    bytes_per_row = n_lane * (2 * 2 * (in_b + out_b) + 8 * 4)
    budget = (16 if big_vmem else 8) * 1024 * 1024
    cap = 4096 if big_vmem else 2048
    tm = max(align, budget // bytes_per_row)
    tm = min(tm, cap)
    if multi_core and rows >= 8 * align:
        # Keep >= ~8 grid steps so the 'parallel' axis can shard across both
        # TensorCores (v7x only; pointless per-step overhead on v5e/v6e).
        tm = min(tm, max(align, rows // 8))
    tm = max(align, (tm // align) * align)
    if rows <= tm:
        tm = rows  # small problem: one full-extent block is legal & cheap
    return tm


def _rmsnorm_mxu_kernel(q_ref, k_ref, scale_ref, seg_ref, qo_ref, ko_ref, *, inv_d):
    """Row sum-of-squares via MXU matmul against a resident segment matrix.

    seg is all-ones (rowwise / padded D) or block-diagonal ones (lane-packed
    small D); the matmul returns the per-row (per-segment) sum replicated
    across all lanes, so no XLU reduce or broadcast is needed.
    """
    q = q_ref[...].astype(jnp.float32)
    k = k_ref[...].astype(jnp.float32)
    seg = seg_ref[...]
    q_ss = jnp.dot(q * q, seg, preferred_element_type=jnp.float32)
    k_ss = jnp.dot(k * k, seg, preferred_element_type=jnp.float32)
    q_rrms = jax.lax.rsqrt(q_ss * inv_d + _EPS)
    k_rrms = jax.lax.rsqrt(k_ss * inv_d + _EPS)
    scales = scale_ref[...]
    qo_ref[...] = (q * q_rrms * scales[0:1, :]).astype(qo_ref.dtype)
    ko_ref[...] = (k * k_rrms * scales[1:2, :]).astype(ko_ref.dtype)


def _rmsnorm_xlu_kernel(q_ref, k_ref, scale_ref, qo_ref, ko_ref, *, inv_d):
    """XLU lane-reduce variant (kept for v5e, where the f32 MXU reduce is not free)."""
    q = q_ref[...].astype(jnp.float32)
    k = k_ref[...].astype(jnp.float32)
    q_rrms = jax.lax.rsqrt(jnp.sum(q * q, axis=-1, keepdims=True) * inv_d + _EPS)
    k_rrms = jax.lax.rsqrt(jnp.sum(k * k, axis=-1, keepdims=True) * inv_d + _EPS)
    scales = scale_ref[...]
    qo_ref[...] = (q * q_rrms * scales[0:1, :]).astype(qo_ref.dtype)
    ko_ref[...] = (k * k_rrms * scales[1:2, :]).astype(ko_ref.dtype)


def qknorm(q, k, v, query_scale, key_scale):
    """QKNorm forward: RMSNorm(q) * q_scale, RMSNorm(k) * k_scale, cast to v.dtype."""
    assert q.shape == k.shape
    D = q.shape[-1]
    lead = q.shape[:-1]
    R = math.prod(lead)
    out_dtype = v.dtype

    kind = _chip_kind()
    is_v5e = ("v5 lite" in kind) or ("v5e" in kind) or ("v5litepod" in kind)
    is_v7 = "v7" in kind

    q2 = q.reshape(R, D)
    k2 = k.reshape(R, D)
    qs = query_scale.astype(jnp.float32).reshape(1, D)
    ks = key_scale.astype(jnp.float32).reshape(1, D)

    if D % 128 == 0:
        # Production flux path (D=128): already lane-dense.
        mode = "rowwise"
        n_lane = D
        rows = R
    elif (D < 128) and (128 % D == 0) and (R % (128 // D) == 0):
        # Lane-dense packing: fold 128//D rows into one 128-wide lane row.
        mode = "packed"
        g = 128 // D
        n_lane = 128
        rows = R // g
        q2 = q2.reshape(rows, n_lane)
        k2 = k2.reshape(rows, n_lane)
        qs = jnp.tile(qs, (1, g))
        ks = jnp.tile(ks, (1, g))
    else:
        # Lane padding: keep output stores full-width (no masked vst.msk path).
        mode = "padded"
        n_lane = _round_up(D, 128)
        pad = n_lane - D
        rows = R
        q2 = jnp.pad(q2, ((0, 0), (0, pad)))
        k2 = jnp.pad(k2, ((0, 0), (0, pad)))
        qs = jnp.pad(qs, ((0, 0), (0, pad)))
        ks = jnp.pad(ks, ((0, 0), (0, pad)))

    scale2 = jnp.concatenate([qs, ks], axis=0)  # (2, n_lane), resident block
    inv_d = 1.0 / D

    # MXU row-reduce on v6e/v7x (idle vector-extended slot; removes the XLU
    # bottleneck at large tiles).  On v5e keep the XLU reduce for the
    # rowwise/padded paths; the packed path stays on the MXU (segmented
    # reduction has no cheap XLU form).  Guard against huge resident matrices.
    use_mxu = (mode == "packed") or ((not is_v5e) and n_lane <= 512)

    tm = _choose_row_tile(rows, n_lane, q2.dtype, out_dtype,
                          multi_core=is_v7, big_vmem=is_v7)
    grid = (pl.cdiv(rows, tm),)

    row_spec = pl.BlockSpec((tm, n_lane), lambda i: (i, 0))
    # Constant-index blocks: the pipeline only re-issues a DMA when the block
    # index changes, so the scales / segment matrix stay resident in VMEM.
    scale_spec = pl.BlockSpec((2, n_lane), lambda i: (0, 0))

    if use_mxu:
        if mode == "packed":
            lane = jnp.arange(n_lane, dtype=jnp.int32)
            seg = (lane[:, None] // D == lane[None, :] // D).astype(jnp.float32)
        else:
            seg = jnp.ones((n_lane, n_lane), jnp.float32)
        kernel = functools.partial(_rmsnorm_mxu_kernel, inv_d=inv_d)
        in_specs = [row_spec, row_spec, scale_spec,
                    pl.BlockSpec((n_lane, n_lane), lambda i: (0, 0))]
        args = (q2, k2, scale2, seg)
    else:
        kernel = functools.partial(_rmsnorm_xlu_kernel, inv_d=inv_d)
        in_specs = [row_spec, row_spec, scale_spec]
        args = (q2, k2, scale2)

    qo2, ko2 = pl.pallas_call(
        kernel,
        out_shape=(jax.ShapeDtypeStruct((rows, n_lane), out_dtype),
                   jax.ShapeDtypeStruct((rows, n_lane), out_dtype)),
        grid_spec=pltpu.PrefetchScalarGridSpec(
            num_scalar_prefetch=0,
            grid=grid,
            in_specs=in_specs,
            out_specs=[row_spec, row_spec],
        ),
        compiler_params=pltpu.CompilerParams(
            dimension_semantics=("parallel",),
            vmem_limit_bytes=32 * 1024 * 1024),
    )(*args)

    if mode == "packed":
        qo2 = qo2.reshape(R, D)
        ko2 = ko2.reshape(R, D)
    elif mode == "padded":
        qo2 = qo2[:, :D]
        ko2 = ko2[:, :D]
    return qo2.reshape(*lead, D), ko2.reshape(*lead, D)


def _reference_qknorm(q, k, v, query_scale, key_scale):
    def rmsnorm(x, scale):
        xf = x.astype(jnp.float32)
        rrms = jax.lax.rsqrt(jnp.mean(xf * xf, axis=-1, keepdims=True) + _EPS)
        return (xf * rrms * scale.astype(jnp.float32)).astype(x.dtype)

    qn = rmsnorm(q, query_scale).astype(v.dtype)
    kn = rmsnorm(k, key_scale).astype(v.dtype)
    return qn, kn


if __name__ == "__main__":
    key = jax.random.PRNGKey(0)
    kq, kk, kv = jax.random.split(key, 3)

    # Small flux-like attention shapes: (batch, heads, seq, head_dim).
    B, H, L, D = 2, 4, 8, 32
    q = jax.random.normal(kq, (B, H, L, D), dtype=jnp.float32)
    k = jax.random.normal(kk, (B, H, L, D), dtype=jnp.float32)
    v = jax.random.normal(kv, (B, H, L, D), dtype=jnp.bfloat16)

    # Deterministic parameter init (ones plus a small perturbation).
    query_scale = jnp.ones((D,), jnp.float32) + 0.01 * jnp.arange(D, dtype=jnp.float32)
    key_scale = jnp.ones((D,), jnp.float32) - 0.01 * jnp.arange(D, dtype=jnp.float32)

    q_out, k_out = qknorm(q, k, v, query_scale, key_scale)
    q_out, k_out = jax.block_until_ready((q_out, k_out))
    q_ref, k_ref = _reference_qknorm(q, k, v, query_scale, key_scale)

    assert q_out.dtype == v.dtype and k_out.dtype == v.dtype
    assert q_out.shape == q.shape and k_out.shape == k.shape
    assert jnp.allclose(q_out.astype(jnp.float32), q_ref.astype(jnp.float32),
                        atol=1e-2, rtol=1e-2)
    assert jnp.allclose(k_out.astype(jnp.float32), k_ref.astype(jnp.float32),
                        atol=1e-2, rtol=1e-2)

    # Production-flux head_dim (D=128, bf16): exercises the lane-dense rowwise
    # path with the MXU row-reduction and the bf16 sublane alignment.
    B2, H2, L2, D2 = 1, 2, 16, 128
    ka, kb, kc, _ = jax.random.split(key, 4)
    q_b = jax.random.normal(ka, (B2, H2, L2, D2), dtype=jnp.bfloat16)
    k_b = jax.random.normal(kb, (B2, H2, L2, D2), dtype=jnp.bfloat16)
    v_b = jax.random.normal(kc, (B2, H2, L2, D2), dtype=jnp.bfloat16)
    qs_b = jnp.ones((D2,), jnp.float32)
    ks_b = jnp.ones((D2,), jnp.float32) * 0.5

    qo_b, ko_b = qknorm(q_b, k_b, v_b, qs_b, ks_b)
    qo_b, ko_b = jax.block_until_ready((qo_b, ko_b))
    qr_b, kr_b = _reference_qknorm(q_b, k_b, v_b, qs_b, ks_b)
    assert jnp.allclose(qo_b.astype(jnp.float32), qr_b.astype(jnp.float32),
                        atol=2e-2, rtol=2e-2)
    assert jnp.allclose(ko_b.astype(jnp.float32), kr_b.astype(jnp.float32),
                        atol=2e-2, rtol=2e-2)

    # Awkward head_dim (D=96): exercises the new lane-padded path (zero-pad to
    # 128 lanes, mean uses 1/D, outputs sliced back).
    B3, H3, L3, D3 = 2, 2, 8, 96
    kd, ke, kf = jax.random.split(jax.random.PRNGKey(1), 3)
    q_c = jax.random.normal(kd, (B3, H3, L3, D3), dtype=jnp.float32)
    k_c = jax.random.normal(ke, (B3, H3, L3, D3), dtype=jnp.float32)
    v_c = jax.random.normal(kf, (B3, H3, L3, D3), dtype=jnp.float32)
    qs_c = jnp.ones((D3,), jnp.float32) * 1.1
    ks_c = jnp.ones((D3,), jnp.float32) * 0.9

    qo_c, ko_c = qknorm(q_c, k_c, v_c, qs_c, ks_c)
    qo_c, ko_c = jax.block_until_ready((qo_c, ko_c))
    qr_c, kr_c = _reference_qknorm(q_c, k_c, v_c, qs_c, ks_c)
    assert jnp.allclose(qo_c, qr_c, atol=1e-2, rtol=1e-2)
    assert jnp.allclose(ko_c, kr_c, atol=1e-2, rtol=1e-2)

    print("KERNEL_OK")
</pallas_src>

<mosaic_0001>
module attributes {stable_mosaic.version = 11 : i64} {
  func.func @_rmsnorm_mxu_kernel(%arg0: i32, %arg1: memref<16x128xf32, #tpu.memory_space<vmem>>, %arg2: memref<16x128xf32, #tpu.memory_space<vmem>>, %arg3: memref<2x128xf32, #tpu.memory_space<vmem>>, %arg4: memref<128x128xf32, #tpu.memory_space<vmem>>, %arg5: memref<16x128xbf16, #tpu.memory_space<vmem>>, %arg6: memref<16x128xbf16, #tpu.memory_space<vmem>>) attributes {dimension_semantics = [#tpu.dimension_semantics<parallel>], iteration_bounds = array<i64: 1>, scalar_prefetch = 0 : i64, scratch_operands = 0 : i64, tpu.core_type = #tpu.core_type<tc>, window_params = [{transform_indices = @transform_0, window_bounds = array<i64: 16, 128>}, {transform_indices = @transform_1, window_bounds = array<i64: 16, 128>}, {pipeline_mode = #tpu.pipeline_mode<synchronous>, transform_indices = @transform_2, window_bounds = array<i64: 2, 128>}, {pipeline_mode = #tpu.pipeline_mode<synchronous>, transform_indices = @transform_3, window_bounds = array<i64: 128, 128>}, {transform_indices = @transform_4, window_bounds = array<i64: 16, 128>}, {transform_indices = @transform_5, window_bounds = array<i64: 16, 128>}]} {
    %c0 = arith.constant 0 : index
    %c0_0 = arith.constant 0 : index
    %0 = vector.load %arg1[%c0, %c0_0] : memref<16x128xf32, #tpu.memory_space<vmem>>, vector<16x128xf32>
    %c0_1 = arith.constant 0 : index
    %c0_2 = arith.constant 0 : index
    %1 = vector.load %arg2[%c0_1, %c0_2] : memref<16x128xf32, #tpu.memory_space<vmem>>, vector<16x128xf32>
    %c0_3 = arith.constant 0 : index
    %c0_4 = arith.constant 0 : index
    %2 = vector.load %arg4[%c0_3, %c0_4] : memref<128x128xf32, #tpu.memory_space<vmem>>, vector<128x128xf32>
    %3 = arith.mulf %0, %0 : vector<16x128xf32>
    %cst = arith.constant dense<0.000000e+00> : vector<16x128xf32>
    %4 = tpu.matmul %3, %2, %cst {dimension_numbers = #tpu.dot_dimension_numbers<[1], [0], [0], [1], [0, 0, 1, 1], [], []>} : vector<16x128xf32>, vector<128x128xf32>, vector<16x128xf32> -> vector<16x128xf32>
    %5 = arith.mulf %1, %1 : vector<16x128xf32>
    %cst_5 = arith.constant dense<0.000000e+00> : vector<16x128xf32>
    %6 = tpu.matmul %5, %2, %cst_5 {dimension_numbers = #tpu.dot_dimension_numbers<[1], [0], [0], [1], [0, 0, 1, 1], [], []>} : vector<16x128xf32>, vector<128x128xf32>, vector<16x128xf32> -> vector<16x128xf32>
    %cst_6 = arith.constant 3.125000e-02 : f32
    %7 = vector.broadcast %cst_6 : f32 to vector<16x128xf32>
    %8 = arith.mulf %4, %7 : vector<16x128xf32>
    %cst_7 = arith.constant 9.99999997E-7 : f32
    %9 = vector.broadcast %cst_7 : f32 to vector<16x128xf32>
    %10 = arith.addf %8, %9 : vector<16x128xf32>
    %11 = math.rsqrt %10 : vector<16x128xf32>
    %cst_8 = arith.constant 3.125000e-02 : f32
    %12 = vector.broadcast %cst_8 : f32 to vector<16x128xf32>
    %13 = arith.mulf %6, %12 : vector<16x128xf32>
    %cst_9 = arith.constant 9.99999997E-7 : f32
    %14 = vector.broadcast %cst_9 : f32 to vector<16x128xf32>
    %15 = arith.addf %13, %14 : vector<16x128xf32>
    %16 = math.rsqrt %15 : vector<16x128xf32>
    %c0_10 = arith.constant 0 : index
    %c0_11 = arith.constant 0 : index
    %17 = vector.load %arg3[%c0_10, %c0_11] : memref<2x128xf32, #tpu.memory_space<vmem>>, vector<2x128xf32>
    %18 = arith.mulf %0, %11 : vector<16x128xf32>
    %19 = vector.extract_strided_slice %17 {offsets = [0, 0], sizes = [1, 128], strides = [1, 1]} : vector<2x128xf32> to vector<1x128xf32>
    %20 = vector.broadcast %19 : vector<1x128xf32> to vector<16x128xf32>
    %21 = arith.mulf %18, %20 : vector<16x128xf32>
    %22 = arith.truncf %21 : vector<16x128xf32> to vector<16x128xbf16>
    %c0_12 = arith.constant 0 : index
    %c0_13 = arith.constant 0 : index
    %23 = vector.load %arg5[%c0_12, %c0_13] : memref<16x128xbf16, #tpu.memory_space<vmem>>, vector<16x128xbf16>
    tpu.vector_store %arg5[%c0_12, %c0_13], %22 {strides = array<i32>} : memref<16x128xbf16, #tpu.memory_space<vmem>>, vector<16x128xbf16>,
    %24 = arith.mulf %1, %16 : vector<16x128xf32>
    %25 = vector.extract_strided_slice %17 {offsets = [1, 0], sizes = [1, 128], strides = [1, 1]} : vector<2x128xf32> to vector<1x128xf32>
    %26 = vector.broadcast %25 : vector<1x128xf32> to vector<16x128xf32>
    %27 = arith.mulf %24, %26 : vector<16x128xf32>
    %28 = arith.truncf %27 : vector<16x128xf32> to vector<16x128xbf16>
    %c0_14 = arith.constant 0 : index
    %c0_15 = arith.constant 0 : index
    %29 = vector.load %arg6[%c0_14, %c0_15] : memref<16x128xbf16, #tpu.memory_space<vmem>>, vector<16x128xbf16>
    tpu.vector_store %arg6[%c0_14, %c0_15], %28 {strides = array<i32>} : memref<16x128xbf16, #tpu.memory_space<vmem>>, vector<16x128xbf16>,
    return
  }
  func.func @transform_0(%arg0: i32) -> (i32, i32) {
    %c0_i32 = arith.constant 0 : i32
    %c0_i32_0 = arith.constant 0 : i32
    return %arg0, %c0_i32 : i32, i32
  }
  func.func @transform_1(%arg0: i32) -> (i32, i32) {
    %c0_i32 = arith.constant 0 : i32
    %c0_i32_0 = arith.constant 0 : i32
    return %arg0, %c0_i32 : i32, i32
  }
  func.func @transform_2(%arg0: i32) -> (i32, i32) {
    %c0_i32 = arith.constant 0 : i32
    %c0_i32_0 = arith.constant 0 : i32
    %c0_i32_1 = arith.constant 0 : i32
    return %c0_i32, %c0_i32_0 : i32, i32
  }
  func.func @transform_3(%arg0: i32) -> (i32, i32) {
    %c0_i32 = arith.constant 0 : i32
    %c0_i32_0 = arith.constant 0 : i32
    %c0_i32_1 = arith.constant 0 : i32
    return %c0_i32, %c0_i32_0 : i32, i32
  }
  func.func @transform_4(%arg0: i32) -> (i32, i32) {
    %c0_i32 = arith.constant 0 : i32
    %c0_i32_0 = arith.constant 0 : i32
    return %arg0, %c0_i32 : i32, i32
  }
  func.func @transform_5(%arg0: i32) -> (i32, i32) {
    %c0_i32 = arith.constant 0 : i32
    %c0_i32_0 = arith.constant 0 : i32
    return %arg0, %c0_i32 : i32, i32
  }
}

</mosaic_0001>

<llo_original>
// kernel: tpu_custom_call.1
$region0: #{tpu_custom_call.1}
  #allocation0 [shape = 'u32[]', space=smem, size = 0x4, offset = 0x4, fixed_abs, tag = 'smem constant byte address 0x4 - core index']
  #allocation1 [shape = 'u32[144,128]{1,0:T(1,128)}', space=vmem, size = 0x12000, scoped, tag = 'internal scratch']
  %s0 = inlined_call_operand.hbm [shape: f32[16,128], index: 0, kind: input, shape index: {}]
  %s1 = inlined_call_operand.hbm [shape: f32[16,128], index: 1, kind: input, shape index: {}]
  %s2 = inlined_call_operand.vmem [shape: f32[2,128], index: 2, kind: input, shape index: {}]
  %s3 = inlined_call_operand.hbm [shape: f32[128,128], index: 3, kind: input, shape index: {}]
  %s4 = inlined_call_operand.hbm [shape: bf16[16,128], index: 4, kind: output, shape index: {0}]
  %s5 = inlined_call_operand.hbm [shape: bf16[16,128], index: 5, kind: output, shape index: {1}]
  %6 = xla_tuple %s4, %s5
  %s7 = sld [smem:[#allocation0]]
  $region46: #{tpu_custom_call.1} parent=0
    _
  %s9 = ssub.s32 1, %s7
  %s10 = scalar_select 0, %s9, %s7
  $region1: #{tpu_custom_call.1} parent=0
    #allocation2 [shape = 'u8[8192]{0}', space=vmem, size = 0x2000, scoped, tag = 'input window, operand 0, single buffered']
    #allocation3 [shape = 's32[1]{0}', space=sflag, size = 0x4, scoped, tag = 'scoped memory for tpu_custom_call.1']
    #allocation4 [shape = 's32[1]{0}', space=sflag, size = 0x4, scoped, tag = 'scoped memory for tpu_custom_call.1']
    #allocation5 [shape = 'u8[8192]{0}', space=vmem, size = 0x2000, scoped, tag = 'input window, operand 1, single buffered']
    #allocation6 [shape = 's32[1]{0}', space=sflag, size = 0x4, scoped, tag = 'scoped memory for tpu_custom_call.1']
    #allocation7 [shape = 'u8[65536]{0}', space=vmem, size = 0x10000, scoped, tag = 'input window, operand 3, single buffered']
    #allocation8 [shape = 'u8[4096]{0}', space=vmem, size = 0x1000, scoped, tag = 'output window, operand 0, single buffered']
    #allocation9 [shape = 'u8[4096]{0}', space=vmem, size = 0x1000, scoped, tag = 'output window, operand 1, single buffered']
    #allocation10 [shape = 's32[1]{0}', space=sflag, size = 0x4, scoped, tag = 'scoped memory for tpu_custom_call.1']
    %11 = vsyncpa [#allocation3], 0
    %12 = vsyncpa [#allocation6], 0
    %13 = vsyncpa [#allocation4], 0
    %14 = vsyncpa [#allocation10], 0
    // Predicated region
    $region2: #{tpu_custom_call.1} parent=1 // pred_check
      _
    $region3: #{tpu_custom_call.1} parent=1 // pred_check_branch
      %16 = sbr.rel (0) target = $region5
    $region4: #{tpu_custom_call.1} parent=1 // pred_region
      %s18 = ssub.s32 256, 256
      %19 = vsyncadd [#allocation3], %s18
      %s20 = sshll.u32 [#allocation2], 4
      %s21 = int_to_ptr.vmem [resolvable:$true] %s20
      %26 = dma.hbm_to_vmem [thread:$0]  %s0, 256, %s21, [#allocation3], 128, 128, 8
    $region5: #{tpu_custom_call.1} parent=1 // pred_fallthru
      _
    // Predicated region
    $region6: #{tpu_custom_call.1} parent=1 // pred_check
      _
    $region7: #{tpu_custom_call.1} parent=1 // pred_check_branch
      %28 = sbr.rel (0) target = $region9
    $region8: #{tpu_custom_call.1} parent=1 // pred_region
      %s30 = ssub.s32 256, 256
      %31 = vsyncadd [#allocation6], %s30
      %s32 = sshll.u32 [#allocation5], 4
      %s33 = int_to_ptr.vmem [resolvable:$true] %s32
      %38 = dma.hbm_to_vmem [thread:$0]  %s1, 256, %s33, [#allocation6], 128, 128, 8
    $region9: #{tpu_custom_call.1} parent=1 // pred_fallthru
      _
    // Predicated region
    $region10: #{tpu_custom_call.1} parent=1 // pred_check
      _
    $region11: #{tpu_custom_call.1} parent=1 // pred_check_branch
      %40 = sbr.rel (0) target = $region13
    $region12: #{tpu_custom_call.1} parent=1 // pred_region
      _
    $region13: #{tpu_custom_call.1} parent=1 // pred_fallthru
      _
    // Predicated region
    $region14: #{tpu_custom_call.1} parent=1 // pred_check
      _
    $region15: #{tpu_custom_call.1} parent=1 // pred_check_branch
      %42 = sbr.rel (0) target = $region17
    $region16: #{tpu_custom_call.1} parent=1 // pred_region
      %s44 = ssub.s32 2048, 2048
      %45 = vsyncadd [#allocation6], %s44
      %s46 = sshll.u32 [#allocation7], 4
      %s47 = int_to_ptr.vmem [resolvable:$true] %s46
      %52 = dma.hbm_to_vmem [thread:$0]  %s3, 2048, %s47, [#allocation6], 128, 128, 8
    $region17: #{tpu_custom_call.1} parent=1 // pred_fallthru
      _
    // Predicated region
    $region18: #{tpu_custom_call.1} parent=1 // pred_check
      _
    $region19: #{tpu_custom_call.1} parent=1 // pred_check_branch
      %54 = sbr.rel (0) target = $region21
    $region20: #{tpu_custom_call.1} parent=1 // pred_region
      %55 = dma.done [#allocation3], 256
    $region21: #{tpu_custom_call.1} parent=1 // pred_fallthru
      _
    // Predicated region
    $region22: #{tpu_custom_call.1} parent=1 // pred_check
      _
    $region23: #{tpu_custom_call.1} parent=1 // pred_check_branch
      %57 = sbr.rel (0) target = $region25
    $region24: #{tpu_custom_call.1} parent=1 // pred_region
      %58 = dma.done [#allocation6], 256
    $region25: #{tpu_custom_call.1} parent=1 // pred_fallthru
      _
    // Predicated region
    $region26: #{tpu_custom_call.1} parent=1 // pred_check
      _
    $region27: #{tpu_custom_call.1} parent=1 // pred_check_branch
      %60 = sbr.rel (0) target = $region29
    $region28: #{tpu_custom_call.1} parent=1 // pred_region
      %61 = dma.done [#allocation6], 2048
    $region29: #{tpu_custom_call.1} parent=1 // pred_fallthru
      _
    %v62 = vld [vmem:[#allocation2] sm:$0xff]
    %v63 = vld [vmem:[#allocation2 + $0x8] sm:$0xff]
    %v64 = vld [vmem:[#allocation5] sm:$0xff]
    %v65 = vld [vmem:[#allocation5 + $0x8] sm:$0xff]
    %v66 = vld [vmem:[#allocation7] sm:$0xff]
    %v67 = vld [vmem:[#allocation7 + $0x8] sm:$0xff]
    %v68 = vld [vmem:[#allocation7 + $0x10] sm:$0xff]
    %v69 = vld [vmem:[#allocation7 + $0x18] sm:$0xff]
    %v70 = vld [vmem:[#allocation7 + $0x20] sm:$0xff]
    %v71 = vld [vmem:[#allocation7 + $0x28] sm:$0xff]
    %v72 = vld [vmem:[#allocation7 + $0x30] sm:$0xff]
    %v73 = vld [vmem:[#allocation7 + $0x38] sm:$0xff]
    %v74 = vld [vmem:[#allocation7 + $0x40] sm:$0xff]
    %v75 = vld [vmem:[#allocation7 + $0x48] sm:$0xff]
    %v76 = vld [vmem:[#allocation7 + $0x50] sm:$0xff]
    %v77 = vld [vmem:[#allocation7 + $0x58] sm:$0xff]
    %v78 = vld [vmem:[#allocation7 + $0x60] sm:$0xff]
    %v79 = vld [vmem:[#allocation7 + $0x68] sm:$0xff]
    %v80 = vld [vmem:[#allocation7 + $0x70] sm:$0xff]
    %v81 = vld [vmem:[#allocation7 + $0x78] sm:$0xff]
    %v82 = vmul.f32 %v62, %v62
    %v83 = vmul.f32 %v63, %v63
    %84 = vmatprep.subr.mxu0 0.0
    %85 = vmatpush1.msra.mxu0 %v66
    %86 = vmatprep.subr.mxu0 0.0
    %87 = vmatpush1.msra.mxu0 %v67
    %88 = vmatprep.subr.mxu0 0.0
    %89 = vmatpush1.msra.mxu0 %v68
    %90 = vmatprep.subr.mxu0 0.0
    %91 = vmatpush1.msra.mxu0 %v69
    %92 = vmatprep.subr.mxu0 0.0
    %93 = vmatpush1.msra.mxu0 %v70
    %94 = vmatprep.subr.mxu0 0.0
    %95 = vmatpush1.msra.mxu0 %v71
    %96 = vmatprep.subr.mxu0 0.0
    %97 = vmatpush1.msra.mxu0 %v72
    %98 = vmatprep.subr.mxu0 0.0
    %99 = vmatpush1.msra.mxu0 %v73
    %100 = vmatprep.subr.mxu0 0.0
    %101 = vmatpush1.msra.mxu0 %v74
    %102 = vmatprep.subr.mxu0 0.0
    %103 = vmatpush1.msra.mxu0 %v75
    %104 = vmatprep.subr.mxu0 0.0
    %105 = vmatpush1.msra.mxu0 %v76
    %106 = vmatprep.subr.mxu0 0.0
    %107 = vmatpush1.msra.mxu0 %v77
    %108 = vmatprep.subr.mxu0 0.0
    %109 = vmatpush1.msra.mxu0 %v78
    %110 = vmatprep.subr.mxu0 0.0
    %111 = vmatpush1.msra.mxu0 %v79
    %112 = vmatprep.subr.mxu0 0.0
    %113 = vmatpush1.msra.mxu0 %v80
    %114 = vmatprep.subr.mxu0 0.0
    %115 = vmatpush1.msra.mxu0 %v81
    %116 = vmatprep.subr.mxu0 0.0
    %117 = vmatpush1.msra.mxu0 0.0
    %118 = vmatprep.subr.mxu0 0.0
    %119 = vmatpush1.msra.mxu0 0.0
    %120 = vmatprep.subr.mxu0 0.0
    %121 = vmatpush1.msra.mxu0 0.0
    %122 = vmatprep.subr.mxu0 0.0
    %123 = vmatpush1.msra.mxu0 0.0
    %124 = vmatprep.subr.mxu0 0.0
    %125 = vmatpush1.msra.mxu0 0.0
    %126 = vmatprep.subr.mxu0 0.0
    %127 = vmatpush1.msra.mxu0 0.0
    %128 = vmatprep.subr.mxu0 0.0
    %129 = vmatpush1.msra.mxu0 0.0
    %130 = vmatprep.subr.mxu0 0.0
    %131 = vmatpush1.msra.mxu0 0.0
    %132 = vmatprep.subr.mxu0 0.0
    %133 = vmatpush1.msra.mxu0 0.0
    %134 = vmatprep.subr.mxu0 0.0
    %135 = vmatpush1.msra.mxu0 0.0
    %136 = vmatprep.subr.mxu0 0.0
    %137 = vmatpush1.msra.mxu0 0.0
    %138 = vmatprep.subr.mxu0 0.0
    %139 = vmatpush1.msra.mxu0 0.0
    %140 = vmatprep.subr.mxu0 0.0
    %141 = vmatpush1.msra.mxu0 0.0
    %142 = vmatprep.subr.mxu0 0.0
    %143 = vmatpush1.msra.mxu0 0.0
    %144 = vmatprep.subr.mxu0 0.0
    %145 = vmatpush1.msra.mxu0 0.0
    %146 = vmatprep.subr.mxu0 0.0
    %147 = vmatpush1.msra.mxu0 0.0
    %148 = vmatprep.mubr.f32.mxu0 0.0
    %149 = vmatmul.mubr.f32.gmra.mrb[0].mxu0 %v82
    %v150 = vpop.f32.mrb[0].mxu0
    %v151 = vadd.f32 0.0, %v150
    %v152 = vpop.f32.mrb[0].mxu0
    %153 = vmatprep.mubr.f32.mxu0 0.0
    %154 = vmatmul.mubr.f32.gmra.mrb[0].mxu0 %v83
    %v155 = vpop.f32.mrb[0].mxu0
    %v156 = vadd.f32 0.0, %v155
    %v157 = vpop.f32.mrb[0].mxu0
    %158 = vdwg.mxu0
    %v159 = vmul.f32 %v64, %v64
    %v160 = vmul.f32 %v65, %v65
    %161 = vmatprep.subr.mxu0 0.0
    %162 = vmatpush1.msra.mxu0 %v66
    %163 = vmatprep.subr.mxu0 0.0
    %164 = vmatpush1.msra.mxu0 %v67
    %165 = vmatprep.subr.mxu0 0.0
    %166 = vmatpush1.msra.mxu0 %v68
    %167 = vmatprep.subr.mxu0 0.0
    %168 = vmatpush1.msra.mxu0 %v69
    %169 = vmatprep.subr.mxu0 0.0
    %170 = vmatpush1.msra.mxu0 %v70
    %171 = vmatprep.subr.mxu0 0.0
    %172 = vmatpush1.msra.mxu0 %v71
    %173 = vmatprep.subr.mxu0 0.0
    %174 = vmatpush1.msra.mxu0 %v72
    %175 = vmatprep.subr.mxu0 0.0
    %176 = vmatpush1.msra.mxu0 %v73
    %177 = vmatprep.subr.mxu0 0.0
    %178 = vmatpush1.msra.mxu0 %v74
    %179 = vmatprep.subr.mxu0 0.0
    %180 = vmatpush1.msra.mxu0 %v75
    %181 = vmatprep.subr.mxu0 0.0
    %182 = vmatpush1.msra.mxu0 %v76
    %183 = vmatprep.subr.mxu0 0.0
    %184 = vmatpush1.msra.mxu0 %v77
    %185 = vmatprep.subr.mxu0 0.0
    %186 = vmatpush1.msra.mxu0 %v78
    %187 = vmatprep.subr.mxu0 0.0
    %188 = vmatpush1.msra.mxu0 %v79
    %189 = vmatprep.subr.mxu0 0.0
    %190 = vmatpush1.msra.mxu0 %v80
    %191 = vmatprep.subr.mxu0 0.0
    %192 = vmatpush1.msra.mxu0 %v81
    %193 = vmatprep.subr.mxu0 0.0
    %194 = vmatpush1.msra.mxu0 0.0
    %195 = vmatprep.subr.mxu0 0.0
    %196 = vmatpush1.msra.mxu0 0.0
    %197 = vmatprep.subr.mxu0 0.0
    %198 = vmatpush1.msra.mxu0 0.0
    %199 = vmatprep.subr.mxu0 0.0
    %200 = vmatpush1.msra.mxu0 0.0
    %201 = vmatprep.subr.mxu0 0.0
    %202 = vmatpush1.msra.mxu0 0.0
    %203 = vmatprep.subr.mxu0 0.0
    %204 = vmatpush1.msra.mxu0 0.0
    %205 = vmatprep.subr.mxu0 0.0
    %206 = vmatpush1.msra.mxu0 0.0
    %207 = vmatprep.subr.mxu0 0.0
    %208 = vmatpush1.msra.mxu0 0.0
    %209 = vmatprep.subr.mxu0 0.0
    %210 = vmatpush1.msra.mxu0 0.0
    %211 = vmatprep.subr.mxu0 0.0
    %212 = vmatpush1.msra.mxu0 0.0
    %213 = vmatprep.subr.mxu0 0.0
    %214 = vmatpush1.msra.mxu0 0.0
    %215 = vmatprep.subr.mxu0 0.0
    %216 = vmatpush1.msra.mxu0 0.0
    %217 = vmatprep.subr.mxu0 0.0
    %218 = vmatpush1.msra.mxu0 0.0
    %219 = vmatprep.subr.mxu0 0.0
    %220 = vmatpush1.msra.mxu0 0.0
    %221 = vmatprep.subr.mxu0 0.0
    %222 = vmatpush1.msra.mxu0 0.0
    %223 = vmatprep.subr.mxu0 0.0
    %224 = vmatpush1.msra.mxu0 0.0
    %225 = vmatprep.mubr.f32.mxu0 0.0
    %226 = vmatmul.mubr.f32.gmra.mrb[0].mxu0 %v159
    %v227 = vpop.f32.mrb[0].mxu0
    %v228 = vadd.f32 0.0, %v227
    %v229 = vpop.f32.mrb[0].mxu0
    %230 = vmatprep.mubr.f32.mxu0 0.0
    %231 = vmatmul.mubr.f32.gmra.mrb[0].mxu0 %v160
    %v232 = vpop.f32.mrb[0].mxu0
    %v233 = vadd.f32 0.0, %v232
    %v234 = vpop.f32.mrb[0].mxu0
    %235 = vdwg.mxu0
    %v236 = vmul.f32 %v151, 0.03125
    %v237 = vmul.f32 %v156, 0.03125
    %v238 = vadd.f32 %v236, 1e-06
    %v239 = vadd.f32 %v237, 1e-06
    %v240 = vrsqrt.pop %v238
    %v241 = vrsqrt.pop %v239
    %v242 = vmul.f32 %v228, 0.03125
    %v243 = vmul.f32 %v233, 0.03125
    %v244 = vadd.f32 %v242, 1e-06
    %v245 = vadd.f32 %v243, 1e-06
    %v246 = vrsqrt.pop %v244
    %v247 = vrsqrt.pop %v245
    %v248 = vld [vmem:[%s2] sm:$0x3]
    %v249 = vmul.f32 %v62, %v240
    %v250 = vmul.f32 %v63, %v241
    %v251 = vlaneseq
    %v252 = vshrl.u32 %v251, 7
    %v253 = vsub.s32 0, %v252
    %v254 = vrot.slane %v248, %v253
    %v255 = vmul.f32 %v249, %v254
    %v256 = vmul.f32 %v250, %v254
    %v257 = vpack.c.bf16 %v256, %v255
    %v259 = vunpack.c.l.b16 %v257
    %v260 = vunpack.c.h.b16 %v257
    %v261 = vpack.c.b16 %v259, %v259
    %v262 = vpack.c.b16 %v260, %v260
    %265 = vst [vmem:[#allocation8] sm:$0xf] %v261
    %266 = vst [vmem:[#allocation8 + $0x4] sm:$0xf] %v262
    %v267 = vmul.f32 %v64, %v246
    %v268 = vmul.f32 %v65, %v247
    %v269 = vlaneseq
    %v270 = vshrl.u32 %v269, 7
    %v271 = vsub.s32 1, %v270
    %v272 = vrot.slane %v248, %v271
    %v273 = vmul.f32 %v267, %v272
    %v274 = vmul.f32 %v268, %v272
    %v275 = vpack.c.bf16 %v274, %v273
    %v277 = vunpack.c.l.b16 %v275
    %v278 = vunpack.c.h.b16 %v275
    %v279 = vpack.c.b16 %v277, %v277
    %v280 = vpack.c.b16 %v278, %v278
    %283 = vst [vmem:[#allocation9] sm:$0xf] %v279
    %284 = vst [vmem:[#allocation9 + $0x4] sm:$0xf] %v280
    // Predicated region
    $region30: #{tpu_custom_call.1} parent=1 // pred_check
      _
    $region31: #{tpu_custom_call.1} parent=1 // pred_check_branch
      %286 = sbr.rel (0) target = $region33
    $region32: #{tpu_custom_call.1} parent=1 // pred_region
      %s288 = ssub.s32 128, 128
      %289 = vsyncadd [#allocation4], %s288
      %s290 = sshll.u32 [#allocation8], 4
      %s291 = int_to_ptr.vmem [resolvable:$true] %s290
      %296 = dma.vmem_to_hbm [thread:$0]  %s291, 128, %s4, [#allocation4], 64, 64, 4
    $region33: #{tpu_custom_call.1} parent=1 // pred_fallthru
      _
    // Predicated region
    $region34: #{tpu_custom_call.1} parent=1 // pred_check
      _
    $region35: #{tpu_custom_call.1} parent=1 // pred_check_branch
      %298 = sbr.rel (0) target = $region37
    $region36: #{tpu_custom_call.1} parent=1 // pred_region
      %s300 = ssub.s32 128, 128
      %301 = vsyncadd [#allocation10], %s300
      %s302 = sshll.u32 [#allocation9], 4
      %s303 = int_to_ptr.vmem [resolvable:$true] %s302
      %308 = dma.vmem_to_hbm [thread:$0]  %s303, 128, %s5, [#allocation10], 64, 64, 4
    $region37: #{tpu_custom_call.1} parent=1 // pred_fallthru
      _
    // Predicated region
    $region38: #{tpu_custom_call.1} parent=1 // pred_check
      _
    $region39: #{tpu_custom_call.1} parent=1 // pred_check_branch
      %310 = sbr.rel (0) target = $region41
    $region40: #{tpu_custom_call.1} parent=1 // pred_region
      %311 = dma.done [#allocation4], 128
    $region41: #{tpu_custom_call.1} parent=1 // pred_fallthru
      _
    // Predicated region
    $region42: #{tpu_custom_call.1} parent=1 // pred_check
      _
    $region43: #{tpu_custom_call.1} parent=1 // pred_check_branch
      %313 = sbr.rel (0) target = $region45
    $region44: #{tpu_custom_call.1} parent=1 // pred_region
      %314 = dma.done [#allocation10], 128
    $region45: #{tpu_custom_call.1} parent=1 // pred_fallthru
      _
    %315 = vsyncpa [#allocation3], 1
    %316 = vsyncpa [#allocation6], 1
    %317 = vsyncpa [#allocation4], 1
    %318 = vsyncpa [#allocation10], 1

</llo_original>
